<compile_context>
chip_gen: v5e
topology: v5e:2x2
jax: 0.10.0
libtpu: 0.0.40
codegen_flags: <defaults>
</compile_context>

<pallas_src>
import jax
import jax.numpy as jnp
from jax.experimental import pallas as pl
from jax.experimental.pallas import tpu as pltpu


def _global_attention_kernel(w_x_ref, w_outc_ref, x_ref, ctx_ref, out_ref, attn_ref):
    """Blocks: x (TB, D), ctx (TB, L, D), out (TB, D), attn (TB, L); weights resident."""
    x = x_ref[...]                      # (TB, D)    input dtype
    ctx = ctx_ref[...]                  # (TB, L, D) input dtype
    D = x.shape[-1]

    # Fused x-path matmul (one (TB,D)@(D,2D) MXU pass instead of two):
    #   xw[:, :D] = inputs @ W_in^T            (the "target")
    #   xw[:, D:] = inputs @ W_out[:, D:]^T    (inputs' contribution to linear_out)
    xw = jnp.dot(x, w_x_ref[...], preferred_element_type=jnp.float32)   # (TB, 2D) f32
    target = xw[:, :D]                  # lane slice; free when D % 128 == 0
    pre_x = xw[:, D:]

    # Score path on the VPU/XLU (avoids per-batch M=1 MXU matvecs with fresh RHS loads):
    # broadcast target over L (sublanes), multiply, lane-reduce over D.  f32 accumulate.
    scores = jnp.sum(ctx * target[:, None, :], axis=-1)                 # (TB, L) f32

    # TODO(synk): applyMask / masked_fill_(-inf) path not implemented (mask is None in forward()).

    # softmax over sourceL in f32.
    m = jnp.max(scores, axis=-1, keepdims=True)
    e = jnp.exp(scores - m)
    denom = jnp.sum(e, axis=-1, keepdims=True)
    # Exact reciprocal: rows must sum to 1 and the self-test checks at 1e-5.  Flip to
    # approx=True (EUP vrcp, essentially free) if that contract can be relaxed.
    attn = e * pl.reciprocal(denom, approx=False)                       # (TB, L) f32

    # weightedContext: broadcast attn over D (lanes), multiply, sublane-reduce over L.
    weighted = jnp.sum(attn[:, :, None] * ctx, axis=1)                  # (TB, D) f32

    # contextOutput = tanh(weighted @ W_out[:, :D]^T + inputs @ W_out[:, D:]^T)
    pre = jnp.dot(weighted.astype(ctx.dtype), w_outc_ref[...],
                  preferred_element_type=jnp.float32) + pre_x
    out_ref[...] = jnp.tanh(pre).astype(out_ref.dtype)
    attn_ref[...] = attn.astype(attn_ref.dtype)


def _vmem_plan():
    """Returns (vmem_limit_bytes, tile_budget_bytes) sized per TPU generation.

    128 MiB chips (v5e/v6e): limit 96 MiB, budget ~84 MiB.
    64 MiB per-TensorCore (v7x) or unknown: limit 48 MiB, budget ~42 MiB.
    """
    try:
        cap = int(pltpu.get_tpu_info().vmem_capacity_bytes)
    except Exception:
        cap = 64 << 20                              # most conservative: v7x per-TC VMEM
    limit = (cap * 3) // 4
    budget = limit - max(limit // 8, 4 << 20)       # headroom: compiler scratch / f32 temps
    return limit, budget


def _pick_batch_tile(B, L, D, itemsize, budget_bytes, min_steps=4):
    """Batch-tile rows: sublane-aligned, VMEM-budget- and grid-depth-aware."""
    sub = 8 if itemsize >= 4 else (16 if itemsize == 2 else 32)
    weight_bytes = 2 * 3 * D * D * itemsize              # (D,2D)+(D,D) weights, x2 buffers
    per_row = 2 * (L * D + 2 * D + L) * itemsize         # ctx + in + out + attn, double-buffered
    avail = budget_bytes - weight_bytes
    if avail < per_row * sub:
        # TODO(synk): tile the Linear layers over D for very large models instead of failing.
        raise ValueError(
            "GlobalAttention weights + one minimal batch tile exceed the VMEM budget "
            f"({weight_bytes / 2**20:.1f} MiB weights, {budget_bytes / 2**20:.1f} MiB budget); "
            "reduce dim or tile the Linear layers.")
    max_tb = avail // per_row
    b_min = ((B + sub - 1) // sub) * sub                  # B rounded up to a sublane multiple
    tb = min(max_tb, b_min)
    if b_min >= min_steps * sub:                          # keep >= ~min_steps grid steps for overlap
        tb = min(tb, (b_min + min_steps - 1) // min_steps)
    for mult in (256, 128, sub):                          # MXU-row friendly rounding, else sublane
        if tb >= mult:
            tb = (tb // mult) * mult
            break
    return max(int(tb), sub)


@jax.jit
def global_attention(inputs, context, w_in, w_out):
    """inputs: (B, D); context: (B, L, D); w_in: (D, D); w_out: (D, 2*D) (PyTorch (out, in))."""
    B, D = inputs.shape
    _, L, _ = context.shape
    dtype = inputs.dtype
    itemsize = jnp.dtype(dtype).itemsize

    # One-time layout prep outside the kernel (never on the hot path):
    #   fused x-path weight  [W_in^T | (W_out[:, D:])^T]  -> (D, 2D)
    #   context-path weight  (W_out[:, :D])^T             -> (D, D)
    w_x = jnp.concatenate([w_in.T, w_out[:, D:].T], axis=1)
    w_outc = w_out[:, :D].T

    vmem_limit, budget = _vmem_plan()
    tb = _pick_batch_tile(B, L, D, itemsize, budget)

    # Pad the batch to a multiple of the tile (padded rows are zeros; softmax of a zero
    # row is finite) and slice the padding away afterwards.
    B_pad = ((B + tb - 1) // tb) * tb
    if B_pad != B:
        pad = B_pad - B
        inputs_p = jnp.pad(inputs, ((0, pad), (0, 0)))
        context_p = jnp.pad(context, ((0, pad), (0, 0), (0, 0)))
    else:
        inputs_p, context_p = inputs, context

    grid = (B_pad // tb,)

    out, attn = pl.pallas_call(
        _global_attention_kernel,
        grid=grid,
        in_specs=[
            pl.BlockSpec((D, 2 * D), lambda i: (0, 0)),      # fused x-path weight (resident)
            pl.BlockSpec((D, D), lambda i: (0, 0)),          # context-path weight (resident)
            pl.BlockSpec((tb, D), lambda i: (i, 0)),         # inputs tile (dense sublanes)
            pl.BlockSpec((tb, L, D), lambda i: (i, 0, 0)),   # context tile (main HBM stream)
        ],
        out_specs=(
            pl.BlockSpec((tb, D), lambda i: (i, 0)),         # contextOutput tile
            pl.BlockSpec((tb, L), lambda i: (i, 0)),         # attn tile
        ),
        out_shape=(
            jax.ShapeDtypeStruct((B_pad, D), dtype),
            jax.ShapeDtypeStruct((B_pad, L), dtype),         # attn in the input dtype
        ),
        compiler_params=pltpu.CompilerParams(
            dimension_semantics=("parallel",),   # v7x: shard the batch grid over both TCs
            vmem_limit_bytes=vmem_limit,
        ),
    )(w_x, w_outc, inputs_p, context_p)

    return out[:B], attn[:B]


def _reference(inputs, context, w_in, w_out):
    target = inputs @ w_in.T
    scores = jnp.einsum("bld,bd->bl", context, target)
    attn = jax.nn.softmax(scores, axis=-1)
    weighted = jnp.einsum("bl,bld->bd", attn, context)
    combined = jnp.concatenate([weighted, inputs], axis=1)
    return jnp.tanh(combined @ w_out.T), attn


if __name__ == "__main__":
    B, L, D = 2, 8, 32

    key = jax.random.PRNGKey(0)
    k_in, k_ctx, k_win, k_wout = jax.random.split(key, 4)

    inputs = jax.random.normal(k_in, (B, D), dtype=jnp.float32)
    context = jax.random.normal(k_ctx, (B, L, D), dtype=jnp.float32)

    # PyTorch Linear default init: U(-1/sqrt(fan_in), 1/sqrt(fan_in))
    bound_in = 1.0 / (D ** 0.5)
    bound_out = 1.0 / ((2 * D) ** 0.5)
    w_in = jax.random.uniform(k_win, (D, D), jnp.float32, -bound_in, bound_in)
    w_out = jax.random.uniform(k_wout, (D, 2 * D), jnp.float32, -bound_out, bound_out)

    out, attn = global_attention(inputs, context, w_in, w_out)
    jax.block_until_ready((out, attn))

    ref_out, ref_attn = _reference(inputs, context, w_in, w_out)
    assert out.shape == (B, D) and attn.shape == (B, L)
    assert jnp.allclose(out, ref_out, atol=1e-5, rtol=1e-5)
    assert jnp.allclose(attn, ref_attn, atol=1e-5, rtol=1e-5)

    print("KERNEL_OK")
</pallas_src>

<mosaic_0001>
module attributes {stable_mosaic.version = 11 : i64} {
  func.func @_global_attention_kernel(%arg0: i32, %arg1: memref<32x64xf32, #tpu.memory_space<vmem>>, %arg2: memref<32x32xf32, #tpu.memory_space<vmem>>, %arg3: memref<8x32xf32, #tpu.memory_space<vmem>>, %arg4: memref<8x8x32xf32, #tpu.memory_space<vmem>>, %arg5: memref<8x32xf32, #tpu.memory_space<vmem>>, %arg6: memref<8x8xf32, #tpu.memory_space<vmem>>) attributes {dimension_semantics = [#tpu.dimension_semantics<parallel>], iteration_bounds = array<i64: 1>, scalar_prefetch = 0 : i64, scratch_operands = 0 : i64, tpu.core_type = #tpu.core_type<tc>, window_params = [{pipeline_mode = #tpu.pipeline_mode<synchronous>, transform_indices = @transform_0, window_bounds = array<i64: 32, 64>}, {pipeline_mode = #tpu.pipeline_mode<synchronous>, transform_indices = @transform_1, window_bounds = array<i64: 32, 32>}, {transform_indices = @transform_2, window_bounds = array<i64: 8, 32>}, {transform_indices = @transform_3, window_bounds = array<i64: 8, 8, 32>}, {transform_indices = @transform_4, window_bounds = array<i64: 8, 32>}, {transform_indices = @transform_5, window_bounds = array<i64: 8, 8>}]} {
    %c0 = arith.constant 0 : index
    %c0_0 = arith.constant 0 : index
    %0 = vector.load %arg3[%c0, %c0_0] : memref<8x32xf32, #tpu.memory_space<vmem>>, vector<8x32xf32>
    %c0_1 = arith.constant 0 : index
    %c0_2 = arith.constant 0 : index
    %c0_3 = arith.constant 0 : index
    %1 = vector.load %arg4[%c0_1, %c0_2, %c0_3] : memref<8x8x32xf32, #tpu.memory_space<vmem>>, vector<8x8x32xf32>
    %c0_4 = arith.constant 0 : index
    %c0_5 = arith.constant 0 : index
    %2 = vector.load %arg1[%c0_4, %c0_5] : memref<32x64xf32, #tpu.memory_space<vmem>>, vector<32x64xf32>
    %cst = arith.constant dense<0.000000e+00> : vector<8x64xf32>
    %3 = tpu.matmul %0, %2, %cst {dimension_numbers = #tpu.dot_dimension_numbers<[1], [0], [0], [1], [0, 0, 1, 1], [], []>} : vector<8x32xf32>, vector<32x64xf32>, vector<8x64xf32> -> vector<8x64xf32>
    %4 = vector.extract_strided_slice %3 {offsets = [0, 0], sizes = [8, 32], strides = [1, 1]} : vector<8x64xf32> to vector<8x32xf32>
    %5 = vector.extract_strided_slice %3 {offsets = [0, 32], sizes = [8, 32], strides = [1, 1]} : vector<8x64xf32> to vector<8x32xf32>
    %6 = vector.shape_cast %4 : vector<8x32xf32> to vector<8x1x32xf32>
    %7 = vector.broadcast %6 : vector<8x1x32xf32> to vector<8x8x32xf32>
    %8 = arith.mulf %1, %7 : vector<8x8x32xf32>
    %cst_6 = arith.constant dense<0.000000e+00> : vector<8x8xf32>
    %9 = vector.multi_reduction <add>, %8, %cst_6 [2] : vector<8x8x32xf32> to vector<8x8xf32>
    %cst_7 = arith.constant dense<0xFF800000> : vector<8xf32>
    %10 = vector.multi_reduction <maximumf>, %9, %cst_7 [1] : vector<8x8xf32> to vector<8xf32>
    %11 = vector.shape_cast %10 : vector<8xf32> to vector<8x1xf32>
    %12 = vector.broadcast %11 : vector<8x1xf32> to vector<8x8xf32>
    %13 = arith.subf %9, %12 : vector<8x8xf32>
    %14 = math.exp %13 : vector<8x8xf32>
    %cst_8 = arith.constant dense<0.000000e+00> : vector<8xf32>
    %15 = vector.multi_reduction <add>, %14, %cst_8 [1] : vector<8x8xf32> to vector<8xf32>
    %16 = vector.shape_cast %15 : vector<8xf32> to vector<8x1xf32>
    %17 = tpu.reciprocal %16 : vector<8x1xf32> -> vector<8x1xf32>
    %18 = vector.broadcast %17 : vector<8x1xf32> to vector<8x8xf32>
    %19 = arith.mulf %14, %18 : vector<8x8xf32>
    %20 = vector.shape_cast %19 : vector<8x8xf32> to vector<8x8x1xf32>
    %21 = vector.broadcast %20 : vector<8x8x1xf32> to vector<8x8x32xf32>
    %22 = arith.mulf %21, %1 : vector<8x8x32xf32>
    %cst_9 = arith.constant dense<0.000000e+00> : vector<8x32xf32>
    %23 = vector.multi_reduction <add>, %22, %cst_9 [1] : vector<8x8x32xf32> to vector<8x32xf32>
    %c0_10 = arith.constant 0 : index
    %c0_11 = arith.constant 0 : index
    %24 = vector.load %arg2[%c0_10, %c0_11] : memref<32x32xf32, #tpu.memory_space<vmem>>, vector<32x32xf32>
    %cst_12 = arith.constant dense<0.000000e+00> : vector<8x32xf32>
    %25 = tpu.matmul %23, %24, %cst_12 {dimension_numbers = #tpu.dot_dimension_numbers<[1], [0], [0], [1], [0, 0, 1, 1], [], []>} : vector<8x32xf32>, vector<32x32xf32>, vector<8x32xf32> -> vector<8x32xf32>
    %26 = arith.addf %25, %5 : vector<8x32xf32>
    %27 = math.tanh %26 : vector<8x32xf32>
    %c0_13 = arith.constant 0 : index
    %c0_14 = arith.constant 0 : index
    %28 = vector.load %arg5[%c0_13, %c0_14] : memref<8x32xf32, #tpu.memory_space<vmem>>, vector<8x32xf32>
    tpu.vector_store %arg5[%c0_13, %c0_14], %27 {strides = array<i32>} : memref<8x32xf32, #tpu.memory_space<vmem>>, vector<8x32xf32>,
    %c0_15 = arith.constant 0 : index
    %c0_16 = arith.constant 0 : index
    %29 = vector.load %arg6[%c0_15, %c0_16] : memref<8x8xf32, #tpu.memory_space<vmem>>, vector<8x8xf32>
    tpu.vector_store %arg6[%c0_15, %c0_16], %19 {strides = array<i32>} : memref<8x8xf32, #tpu.memory_space<vmem>>, vector<8x8xf32>,
    return
  }
  func.func @transform_0(%arg0: i32) -> (i32, i32) {
    %c0_i32 = arith.constant 0 : i32
    %c0_i32_0 = arith.constant 0 : i32
    %c0_i32_1 = arith.constant 0 : i32
    return %c0_i32, %c0_i32_0 : i32, i32
  }
  func.func @transform_1(%arg0: i32) -> (i32, i32) {
    %c0_i32 = arith.constant 0 : i32
    %c0_i32_0 = arith.constant 0 : i32
    %c0_i32_1 = arith.constant 0 : i32
    return %c0_i32, %c0_i32_0 : i32, i32
  }
  func.func @transform_2(%arg0: i32) -> (i32, i32) {
    %c0_i32 = arith.constant 0 : i32
    %c0_i32_0 = arith.constant 0 : i32
    return %arg0, %c0_i32 : i32, i32
  }
  func.func @transform_3(%arg0: i32) -> (i32, i32, i32) {
    %c0_i32 = arith.constant 0 : i32
    %c0_i32_0 = arith.constant 0 : i32
    %c0_i32_1 = arith.constant 0 : i32
    return %arg0, %c0_i32, %c0_i32_0 : i32, i32, i32
  }
  func.func @transform_4(%arg0: i32) -> (i32, i32) {
    %c0_i32 = arith.constant 0 : i32
    %c0_i32_0 = arith.constant 0 : i32
    return %arg0, %c0_i32 : i32, i32
  }
  func.func @transform_5(%arg0: i32) -> (i32, i32) {
    %c0_i32 = arith.constant 0 : i32
    %c0_i32_0 = arith.constant 0 : i32
    return %arg0, %c0_i32 : i32, i32
  }
}

</mosaic_0001>

<llo_original>
// kernel: global_attention.1
$region0: #{global_attention.1}
  #allocation0 [shape = 'u32[]', space=smem, size = 0x4, offset = 0x4, fixed_abs, tag = 'smem constant byte address 0x4 - core index']
  #allocation1 [shape = 'u32[72,128]{1,0:T(1,128)}', space=vmem, size = 0x9000, scoped, tag = 'internal scratch']
  %s0 = inlined_call_operand.vmem [shape: f32[32,64], index: 0, kind: input, shape index: {}]
  %s1 = inlined_call_operand.vmem [shape: f32[32,32], index: 1, kind: input, shape index: {}]
  %s2 = inlined_call_operand.vmem [shape: f32[8,32], index: 2, kind: input, shape index: {}]
  %s3 = inlined_call_operand.vmem [shape: f32[8,8,32], index: 3, kind: input, shape index: {}]
  %s4 = inlined_call_operand.vmem [shape: f32[8,32], index: 4, kind: output, shape index: {0}]
  %s5 = inlined_call_operand.vmem [shape: f32[8,8], index: 5, kind: output, shape index: {1}]
  %6 = xla_tuple %s4, %s5
  %s7 = sld [smem:[#allocation0]]
  $region34: #{global_attention.1} parent=0
    _
  %s9 = ssub.s32 1, %s7
  %s10 = scalar_select 0, %s9, %s7
  // Predicated region
  $region2: #{global_attention.1} parent=0 // pred_check
    _
  $region3: #{global_attention.1} parent=0 // pred_check_branch
    %12 = sbr.rel (0) target = $region5
  $region4: #{global_attention.1} parent=0 // pred_region
    _
  $region5: #{global_attention.1} parent=0 // pred_fallthru
    _
  // Predicated region
  $region6: #{global_attention.1} parent=0 // pred_check
    _
  $region7: #{global_attention.1} parent=0 // pred_check_branch
    %14 = sbr.rel (0) target = $region9
  $region8: #{global_attention.1} parent=0 // pred_region
    _
  $region9: #{global_attention.1} parent=0 // pred_fallthru
    _
  // Predicated region
  $region10: #{global_attention.1} parent=0 // pred_check
    _
  $region11: #{global_attention.1} parent=0 // pred_check_branch
    %16 = sbr.rel (0) target = $region13
  $region12: #{global_attention.1} parent=0 // pred_region
    _
  $region13: #{global_attention.1} parent=0 // pred_fallthru
    _
  // Predicated region
  $region14: #{global_attention.1} parent=0 // pred_check
    _
  $region15: #{global_attention.1} parent=0 // pred_check_branch
    %18 = sbr.rel (0) target = $region17
  $region16: #{global_attention.1} parent=0 // pred_region
    _
  $region17: #{global_attention.1} parent=0 // pred_fallthru
    _
  %v19 = vld [vmem:[%s2] sm:$0xff]
  %v20 = vld [vmem:[%s3] sm:$0xff]
  %v21 = vld [vmem:[%s3 + $0x8] sm:$0xff]
  %v22 = vld [vmem:[%s3 + $0x10] sm:$0xff]
  %v23 = vld [vmem:[%s3 + $0x18] sm:$0xff]
  %v24 = vld [vmem:[%s3 + $0x20] sm:$0xff]
  %v25 = vld [vmem:[%s3 + $0x28] sm:$0xff]
  %v26 = vld [vmem:[%s3 + $0x30] sm:$0xff]
  %v27 = vld [vmem:[%s3 + $0x38] sm:$0xff]
  %v28 = vld [vmem:[%s0] sm:$0xff]
  %v29 = vld [vmem:[%s0 + $0x8] sm:$0xff]
  %v30 = vld [vmem:[%s0 + $0x10] sm:$0xff]
  %v31 = vld [vmem:[%s0 + $0x18] sm:$0xff]
  %vm32 = vcmask 261120
  %v34 = vsel %vm32, %v19, 0
  %36 = vmatpush.msra.mxu0 0.0
  %37 = vmatpush.msra.mxu0 0.0
  %38 = vmatpush.msra.mxu0 0.0
  %39 = vmatpush.msra.mxu0 0.0
  %40 = vmatpush.msra.mxu0 0.0
  %41 = vmatpush.msra.mxu0 0.0
  %42 = vmatpush.msra.mxu0 0.0
  %43 = vmatpush.msra.mxu0 0.0
  %44 = vmatpush.msra.mxu0 0.0
  %45 = vmatpush.msra.mxu0 0.0
  %46 = vmatpush.msra.mxu0 0.0
  %47 = vmatpush.msra.mxu0 0.0
  %48 = vmatpush.msra.mxu0 %v31
  %49 = vmatpush.msra.mxu0 %v30
  %50 = vmatpush.msra.mxu0 %v29
  %51 = vmatpush.msra.mxu0 %v28
  %52 = vmatmul.f32.gmra.mxu0 %v34
  %v53 = vpop.f32.mrf.mxu0
  %v54 = vadd.f32 0.0, %v53
  %55 = vdwg.mxu0
  %v57 = vrot.slane %v54, 1
  %v58 = vrot.slane %v54, 2
  %v59 = vrot.slane %v54, 3
  %v60 = vrot.slane %v54, 4
  %v61 = vrot.slane %v54, 5
  %v62 = vrot.slane %v54, 6
  %v63 = vrot.slane %v54, 7
  %v64 = vperm.slane %v54, 0
  %v65 = vperm.slane %v57, 0
  %v66 = vperm.slane %v58, 0
  %v67 = vperm.slane %v59, 0
  %v68 = vperm.slane %v60, 0
  %v69 = vperm.slane %v61, 0
  %v70 = vperm.slane %v62, 0
  %v71 = vperm.slane %v63, 0
  %v80 = vmul.f32 %v20, %v64
  %v81 = vmul.f32 %v21, %v65
  %v82 = vmul.f32 %v22, %v66
  %v83 = vmul.f32 %v23, %v67
  %v84 = vmul.f32 %v24, %v68
  %v85 = vmul.f32 %v25, %v69
  %v86 = vmul.f32 %v26, %v70
  %v87 = vmul.f32 %v27, %v71
  %v88 = vsel %vm32, %v80, 0.0
  %89 = vadd.xlane.f32.xlu0 %v88
  %v90 = vpop.xlane.xlu0 %89
  %v91 = vsel %vm32, %v81, 0.0
  %92 = vadd.xlane.f32.xlu0 %v91
  %v93 = vpop.xlane.xlu0 %92
  %v94 = vsel %vm32, %v82, 0.0
  %95 = vadd.xlane.f32.xlu0 %v94
  %v96 = vpop.xlane.xlu0 %95
  %v97 = vsel %vm32, %v83, 0.0
  %98 = vadd.xlane.f32.xlu0 %v97
  %v99 = vpop.xlane.xlu0 %98
  %v100 = vsel %vm32, %v84, 0.0
  %101 = vadd.xlane.f32.xlu0 %v100
  %v102 = vpop.xlane.xlu0 %101
  %v103 = vsel %vm32, %v85, 0.0
  %104 = vadd.xlane.f32.xlu0 %v103
  %v105 = vpop.xlane.xlu0 %104
  %v106 = vsel %vm32, %v86, 0.0
  %107 = vadd.xlane.f32.xlu0 %v106
  %v108 = vpop.xlane.xlu0 %107
  %v109 = vsel %vm32, %v87, 0.0
  %110 = vadd.xlane.f32.xlu0 %v109
  %v111 = vpop.xlane.xlu0 %110
  %v120 = vlaneseq
  %v121 = vand.u32 %v120, 127
  %v122 = vperm.slane %v90, %v121
  %v123 = vperm.slane %v93, %v121
  %v124 = vperm.slane %v96, %v121
  %v125 = vperm.slane %v99, %v121
  %v126 = vperm.slane %v102, %v121
  %v127 = vperm.slane %v105, %v121
  %v128 = vperm.slane %v108, %v121
  %v129 = vperm.slane %v111, %v121
  %vm130 = vcmask 1041409
  %v131 = vsel %vm130, %v123, %v122
  %vm132 = vcmask 1042434
  %v133 = vsel %vm132, %v124, %v131
  %vm134 = vcmask 1043459
  %v135 = vsel %vm134, %v125, %v133
  %vm136 = vcmask 1044484
  %v137 = vsel %vm136, %v126, %v135
  %vm138 = vcmask 1045509
  %v139 = vsel %vm138, %v127, %v137
  %vm140 = vcmask 1046534
  %v141 = vsel %vm140, %v128, %v139
  %vm142 = vcmask 1047559
  %v143 = vsel %vm142, %v129, %v141
  %vm145 = vcmask 64512
  %v146 = vsel %vm145, %v143, -inf
  %147 = vmax.xlane.f32.xlu0 %v146
  %v148 = vpop.xlane.xlu0 %147
  %v150 = vperm.slane %v148, 0
  %v151 = vperm.slane %v148, 1
  %v152 = vperm.slane %v148, 2
  %v153 = vperm.slane %v148, 3
  %v154 = vperm.slane %v148, 4
  %v155 = vperm.slane %v148, 5
  %v156 = vperm.slane %v148, 6
  %v157 = vperm.slane %v148, 7
  %v166 = vsub.f32 %v90, %v150
  %v167 = vsub.f32 %v93, %v151
  %v168 = vsub.f32 %v96, %v152
  %v169 = vsub.f32 %v99, %v153
  %v170 = vsub.f32 %v102, %v154
  %v171 = vsub.f32 %v105, %v155
  %v172 = vsub.f32 %v108, %v156
  %v173 = vsub.f32 %v111, %v157
  %v174 = vmul.f32 %v166, 1.442695
  %v175 = vpow.pop %v174
  %v176 = vmul.f32 %v167, 1.442695
  %v177 = vpow.pop %v176
  %v178 = vmul.f32 %v168, 1.442695
  %v179 = vpow.pop %v178
  %v180 = vmul.f32 %v169, 1.442695
  %v181 = vpow.pop %v180
  %v182 = vmul.f32 %v170, 1.442695
  %v183 = vpow.pop %v182
  %v184 = vmul.f32 %v171, 1.442695
  %v185 = vpow.pop %v184
  %v186 = vmul.f32 %v172, 1.442695
  %v187 = vpow.pop %v186
  %v188 = vmul.f32 %v173, 1.442695
  %v189 = vpow.pop %v188
  %198 = vset.pattern.permute.xlu0 0
  %199 = vperm.xlu0 %198, %v175
  %v200 = vpop.permute.xlu0 %199
  %201 = vset.pattern.permute.xlu0 0
  %202 = vperm.xlu0 %201, %v177
  %v203 = vpop.permute.xlu0 %202
  %204 = vset.pattern.permute.xlu0 0
  %205 = vperm.xlu0 %204, %v179
  %v206 = vpop.permute.xlu0 %205
  %207 = vset.pattern.permute.xlu0 0
  %208 = vperm.xlu0 %207, %v181
  %v209 = vpop.permute.xlu0 %208
  %210 = vset.pattern.permute.xlu0 0
  %211 = vperm.xlu0 %210, %v183
  %v212 = vpop.permute.xlu0 %211
  %213 = vset.pattern.permute.xlu0 0
  %214 = vperm.xlu0 %213, %v185
  %v215 = vpop.permute.xlu0 %214
  %216 = vset.pattern.permute.xlu0 0
  %217 = vperm.xlu0 %216, %v187
  %v218 = vpop.permute.xlu0 %217
  %219 = vset.pattern.permute.xlu0 0
  %220 = vperm.xlu0 %219, %v189
  %v221 = vpop.permute.xlu0 %220
  %v222 = vperm.slane %v200, %v121
  %v223 = vperm.slane %v203, %v121
  %v224 = vperm.slane %v206, %v121
  %v225 = vperm.slane %v209, %v121
  %v226 = vperm.slane %v212, %v121
  %v227 = vperm.slane %v215, %v121
  %v228 = vperm.slane %v218, %v121
  %v229 = vperm.slane %v221, %v121
  %v230 = vsel %vm130, %v223, %v222
  %v231 = vsel %vm132, %v224, %v230
  %v232 = vsel %vm134, %v225, %v231
  %v233 = vsel %vm136, %v226, %v232
  %v234 = vsel %vm138, %v227, %v233
  %v235 = vsel %vm140, %v228, %v234
  %v236 = vsel %vm142, %v229, %v235
  %v238 = vsel %vm145, %v236, 0.0
  %239 = vadd.xlane.f32.xlu0 %v238
  %v240 = vpop.xlane.xlu0 %239
  %v241 = vrcp.pop %v240
  %v242 = vmul.f32 %v240, %v241
  %v243 = vsub.f32 1.0, %v242
  %v244 = vmul.f32 %v241, %v243
  %v245 = vadd.f32 %v241, %v244
  %vm246 = vweird.f32 %v240
  %vm247 = vweird.f32 %v241
  %vm248 = vmor %vm246, %vm247
  %v249 = vsel %vm248, %v241, %v245
  %v250 = vand.u32 2147483647, %v240
  %vm251 = vcmp.eq.f32.partialorder %v250, 8.507059e+37
  %v252 = vand.u32 %v240, 2147483648
  %v253 = vor.u32 1.1754944e-38, %v252
  %v254 = vsel %vm251, %v253, %v249
  %v256 = vperm.slane %v254, 0
  %v257 = vperm.slane %v254, 1
  %v258 = vperm.slane %v254, 2
  %v259 = vperm.slane %v254, 3
  %v260 = vperm.slane %v254, 4
  %v261 = vperm.slane %v254, 5
  %v262 = vperm.slane %v254, 6
  %v263 = vperm.slane %v254, 7
  %v272 = vmul.f32 %v175, %v256
  %v273 = vmul.f32 %v177, %v257
  %v274 = vmul.f32 %v179, %v258
  %v275 = vmul.f32 %v181, %v259
  %v276 = vmul.f32 %v183, %v260
  %v277 = vmul.f32 %v185, %v261
  %v278 = vmul.f32 %v187, %v262
  %v279 = vmul.f32 %v189, %v263
  %281 = vset.pattern.permute.xlu0 0
  %282 = vperm.xlu0 %281, %v272
  %v283 = vpop.permute.xlu0 %282
  %286 = vset.pattern.permute.xlu0 0
  %287 = vperm.xlu0 %286, %v273
  %v288 = vpop.permute.xlu0 %287
  %291 = vset.pattern.permute.xlu0 0
  %292 = vperm.xlu0 %291, %v274
  %v293 = vpop.permute.xlu0 %292
  %296 = vset.pattern.permute.xlu0 0
  %297 = vperm.xlu0 %296, %v275
  %v298 = vpop.permute.xlu0 %297
  %301 = vset.pattern.permute.xlu0 0
  %302 = vperm.xlu0 %301, %v276
  %v303 = vpop.permute.xlu0 %302
  %306 = vset.pattern.permute.xlu0 0
  %307 = vperm.xlu0 %306, %v277
  %v308 = vpop.permute.xlu0 %307
  %311 = vset.pattern.permute.xlu0 0
  %312 = vperm.xlu0 %311, %v278
  %v313 = vpop.permute.xlu0 %312
  %316 = vset.pattern.permute.xlu0 0
  %317 = vperm.xlu0 %316, %v279
  %v318 = vpop.permute.xlu0 %317
  %v320 = vmul.f32 %v283, %v20
  %v321 = vmul.f32 %v288, %v21
  %v322 = vmul.f32 %v293, %v22
  %v323 = vmul.f32 %v298, %v23
  %v324 = vmul.f32 %v303, %v24
  %v325 = vmul.f32 %v308, %v25
  %v326 = vmul.f32 %v313, %v26
  %v327 = vmul.f32 %v318, %v27
  %v328 = vsel %vm32, %v320, 0.0
  %v329 = vrot.slane %v328, 4
  %v330 = vadd.f32 %v328, %v329
  %v331 = vrot.slane %v330, 2
  %v332 = vadd.f32 %v330, %v331
  %v333 = vrot.slane %v332, 1
  %v334 = vadd.f32 %v332, %v333
  %v335 = vsel %vm32, %v321, 0.0
  %v336 = vrot.slane %v335, 4
  %v337 = vadd.f32 %v335, %v336
  %v338 = vrot.slane %v337, 2
  %v339 = vadd.f32 %v337, %v338
  %v340 = vrot.slane %v339, 1
  %v341 = vadd.f32 %v339, %v340
  %v342 = vsel %vm32, %v322, 0.0
  %v343 = vrot.slane %v342, 4
  %v344 = vadd.f32 %v342, %v343
  %v345 = vrot.slane %v344, 2
  %v346 = vadd.f32 %v344, %v345
  %v347 = vrot.slane %v346, 1
  %v348 = vadd.f32 %v346, %v347
  %v349 = vsel %vm32, %v323, 0.0
  %v350 = vrot.slane %v349, 4
  %v351 = vadd.f32 %v349, %v350
  %v352 = vrot.slane %v351, 2
  %v353 = vadd.f32 %v351, %v352
  %v354 = vrot.slane %v353, 1
  %v355 = vadd.f32 %v353, %v354
  %v356 = vsel %vm32, %v324, 0.0
  %v357 = vrot.slane %v356, 4
  %v358 = vadd.f32 %v356, %v357
  %v359 = vrot.slane %v358, 2
  %v360 = vadd.f32 %v358, %v359
  %v361 = vrot.slane %v360, 1
  %v362 = vadd.f32 %v360, %v361
  %v363 = vsel %vm32, %v325, 0.0
  %v364 = vrot.slane %v363, 4
  %v365 = vadd.f32 %v363, %v364
  %v366 = vrot.slane %v365, 2
  %v367 = vadd.f32 %v365, %v366
  %v368 = vrot.slane %v367, 1
  %v369 = vadd.f32 %v367, %v368
  %v370 = vsel %vm32, %v326, 0.0
  %v371 = vrot.slane %v370, 4
  %v372 = vadd.f32 %v370, %v371
  %v373 = vrot.slane %v372, 2
  %v374 = vadd.f32 %v372, %v373
  %v375 = vrot.slane %v374, 1
  %v376 = vadd.f32 %v374, %v375
  %v377 = vsel %vm32, %v327, 0.0
  %v378 = vrot.slane %v377, 4
  %v379 = vadd.f32 %v377, %v378
  %v380 = vrot.slane %v379, 2
  %v381 = vadd.f32 %v379, %v380
  %v382 = vrot.slane %v381, 1
  %v383 = vadd.f32 %v381, %v382
  %v384 = vld [vmem:[%s1] sm:$0xff]
  %v385 = vld [vmem:[%s1 + $0x8] sm:$0xff]
  %v386 = vld [vmem:[%s1 + $0x10] sm:$0xff]
  %v387 = vld [vmem:[%s1 + $0x18] sm:$0xff]
  %v396 = vsel %vm130, %v341, %v334
  %v397 = vsel %vm132, %v348, %v396
  %v398 = vsel %vm134, %v355, %v397
  %v399 = vsel %vm136, %v362, %v398
  %v400 = vsel %vm138, %v369, %v399
  %v401 = vsel %vm140, %v376, %v400
  %v402 = vsel %vm142, %v383, %v401
  %403 = vrot.lane.b32.xlu0 %v54, 96
  %v404 = vpop.permute.xlu0 %403
  %v406 = vsel %vm32, %v402, 0
  %408 = vmatpush.msra.mxu0 0.0
  %409 = vmatpush.msra.mxu0 0.0
  %410 = vmatpush.msra.mxu0 0.0
  %411 = vmatpush.msra.mxu0 0.0
  %412 = vmatpush.msra.mxu0 0.0
  %413 = vmatpush.msra.mxu0 0.0
  %414 = vmatpush.msra.mxu0 0.0
  %415 = vmatpush.msra.mxu0 0.0
  %416 = vmatpush.msra.mxu0 0.0
  %417 = vmatpush.msra.mxu0 0.0
  %418 = vmatpush.msra.mxu0 0.0
  %419 = vmatpush.msra.mxu0 0.0
  %420 = vmatpush.msra.mxu0 %v387
  %421 = vmatpush.msra.mxu0 %v386
  %422 = vmatpush.msra.mxu0 %v385
  %423 = vmatpush.msra.mxu0 %v384
  %424 = vmatmul.f32.gmra.mxu0 %v406
  %v425 = vpop.f32.mrf.mxu0
  %v426 = vadd.f32 %v404, %v425
  %427 = vdwg.mxu0
  %v428 = vtanh.pop %v426
  %429 = vst.msk [vmem:[%s4] sm:$0xff] %vm32, %v428
  %v430 = vperm.slane %v283, %v121
  %v431 = vperm.slane %v288, %v121
  %v432 = vperm.slane %v293, %v121
  %v433 = vperm.slane %v298, %v121
  %v434 = vperm.slane %v303, %v121
  %v435 = vperm.slane %v308, %v121
  %v436 = vperm.slane %v313, %v121
  %v437 = vperm.slane %v318, %v121
  %v438 = vsel %vm130, %v431, %v430
  %v439 = vsel %vm132, %v432, %v438
  %v440 = vsel %vm134, %v433, %v439
  %v441 = vsel %vm136, %v434, %v440
  %v442 = vsel %vm138, %v435, %v441
  %v443 = vsel %vm140, %v436, %v442
  %v444 = vsel %vm142, %v437, %v443
  %446 = vst.msk [vmem:[%s5] sm:$0xff] %vm145, %v444
  // Predicated region
  $region18: #{global_attention.1} parent=0 // pred_check
    _
  $region19: #{global_attention.1} parent=0 // pred_check_branch
    %448 = sbr.rel (0) target = $region21
  $region20: #{global_attention.1} parent=0 // pred_region
    _
  $region21: #{global_attention.1} parent=0 // pred_fallthru
    _
  // Predicated region
  $region22: #{global_attention.1} parent=0 // pred_check
    _
  $region23: #{global_attention.1} parent=0 // pred_check_branch
    %450 = sbr.rel (0) target = $region25
  $region24: #{global_attention.1} parent=0 // pred_region
    _
  $region25: #{global_attention.1} parent=0 // pred_fallthru
    _
  // Predicated region
  $region26: #{global_attention.1} parent=0 // pred_check
    _
  $region27: #{global_attention.1} parent=0 // pred_check_branch
    %452 = sbr.rel (0) target = $region29
  $region28: #{global_attention.1} parent=0 // pred_region
    _
  $region29: #{global_attention.1} parent=0 // pred_fallthru
    _
  // Predicated region
  $region30: #{global_attention.1} parent=0 // pred_check
    _
  $region31: #{global_attention.1} parent=0 // pred_check_branch
    %454 = sbr.rel (0) target = $region33
  $region32: #{global_attention.1} parent=0 // pred_region
    _
  $region33: #{global_attention.1} parent=0 // pred_fallthru
    _

</llo_original>
